<compile_context>
chip_gen: v7x
topology: tpu7x:2x2x1
jax: 0.10.0
libtpu: 0.0.40
codegen_flags: <defaults>
</compile_context>

<pallas_src>
import jax
import jax.numpy as jnp
from jax.experimental import pallas as pl
from jax.experimental.pallas import tpu as pltpu


def _round_up(a, m):
    return (a + m - 1) // m * m


def _pick_tiles(batch, in_f, out_f):
    """Modest default tiles: lane-dense, comfortably within VMEM even on
    v7x (64 MiB) once double-buffered; on v5e/v6e larger tiles would also
    fit but these already hit the roofline for typical GLU sizes."""
    tm = min(_round_up(batch, 8), 256)     # sublane axis of x / out
    tn = min(_round_up(out_f, 128), 256)   # lane axis of out (128-multiple)
    tk = min(_round_up(in_f, 128), 512)    # reduction axis
    return tm, tn, tk


def _glu_kernel(x_ref, w_ref, b_ref, o_ref, acc_ref):
    """One (i, j, k) grid step.

    x_ref  : [tm, tk]         activation tile
    w_ref  : [tk, 2*tn]       fused weight tile ([W_lin_j | W_gate_j])
    b_ref  : [1, 2*tn]        fused bias tile
    o_ref  : [tm, tn]         output tile
    acc_ref: [tm, 2*tn] f32   accumulator, persists across the K grid axis
    """
    k = pl.program_id(2)

    @pl.when(k == 0)
    def _init():
        acc_ref[...] = jnp.zeros_like(acc_ref)

    # Single fused MXU matmul covers both the linear and the gate branch.
    acc_ref[...] += jnp.dot(x_ref[...], w_ref[...],
                            preferred_element_type=jnp.float32)

    @pl.when(k == pl.num_programs(2) - 1)
    def _finalize():
        tn = o_ref.shape[-1]
        acc = acc_ref[...] + b_ref[...]          # bias broadcast over rows, f32
        lin = acc[:, :tn]                        # lane-aligned (tn % 128 == 0)
        gate = acc[:, tn:]
        # sigmoid -> EUP slot, multiply -> VALU: free filler next to the MXU.
        o_ref[...] = (lin * jax.nn.sigmoid(gate)).astype(o_ref.dtype)


def pack_glu_params(w_lin, b_lin, w_gate, b_gate, *, tn, tk):
    """Transpose, pad and block-interleave the GLU parameters.

    Call ONCE at parameter-setup time (not per forward call) to avoid paying
    an HBM transpose/concat of the weights on every invocation.

    w_*: [out_features, in_features] (PyTorch nn.Linear layout), b_*: [out_features].
    Returns (w_fused [K_pad, 2*N_pad], b_fused [1, 2*N_pad], out_features, in_features).
    """
    out_f, in_f = w_lin.shape
    k_pad = _round_up(in_f, tk)
    n_pad = _round_up(out_f, tn)
    nb = n_pad // tn

    def prep_w(w):
        wt = jnp.asarray(w).T                                   # [in, out]
        return jnp.pad(wt, ((0, k_pad - in_f), (0, n_pad - out_f)))

    wl = prep_w(w_lin).reshape(k_pad, nb, tn)
    wg = prep_w(w_gate).reshape(k_pad, nb, tn)
    w_fused = jnp.concatenate([wl, wg], axis=2).reshape(k_pad, 2 * n_pad)

    def prep_b(b):
        bp = jnp.pad(jnp.asarray(b).reshape(1, out_f), ((0, 0), (0, n_pad - out_f)))
        return bp.reshape(1, nb, tn)

    b_fused = jnp.concatenate([prep_b(b_lin), prep_b(b_gate)],
                              axis=2).reshape(1, 2 * n_pad)
    return w_fused, b_fused, out_f, in_f


def gated_linear_unit_packed(x, w_fused, b_fused, out_features, in_features,
                             *, tm, tn, tk):
    """x: [B, in_features]; packed params from pack_glu_params. -> [B, out_features]."""
    batch, in_f = x.shape
    assert in_f == in_features
    k_pad, two_n_pad = w_fused.shape
    n_pad = two_n_pad // 2
    m_pad = _round_up(batch, tm)

    x_p = x
    if (m_pad, k_pad) != (batch, in_f):
        x_p = jnp.pad(x, ((0, m_pad - batch), (0, k_pad - in_f)))

    grid = (m_pad // tm, n_pad // tn, k_pad // tk)

    out_padded = pl.pallas_call(
        _glu_kernel,
        out_shape=jax.ShapeDtypeStruct((m_pad, n_pad), x.dtype),
        grid_spec=pltpu.PrefetchScalarGridSpec(
            num_scalar_prefetch=0,
            grid=grid,
            in_specs=[
                # x tile: independent of the N axis (j) -> reused across j.
                pl.BlockSpec((tm, tk), lambda i, j, k: (i, k)),
                # fused weight tile: independent of the batch axis (i).
                pl.BlockSpec((tk, 2 * tn), lambda i, j, k: (k, j)),
                # fused bias tile.
                pl.BlockSpec((1, 2 * tn), lambda i, j, k: (0, j)),
            ],
            out_specs=pl.BlockSpec((tm, tn), lambda i, j, k: (i, j)),
            scratch_shapes=[pltpu.VMEM((tm, 2 * tn), jnp.float32)],
        ),
        compiler_params=pltpu.CompilerParams(
            dimension_semantics=("parallel", "parallel", "arbitrary")),
    )(x_p, w_fused, b_fused)

    return out_padded[:batch, :out_features]


def gated_linear_unit(x, w_lin, b_lin, w_gate, b_gate, *, tiles=None):
    """Convenience wrapper: packs parameters and runs the fused kernel.

    For repeated inference calls, call pack_glu_params once and use
    gated_linear_unit_packed directly.
    # TODO(synk): for tiny shapes (e.g. the 8x32x64 demo) plain XLA fusion is
    # faster than a Pallas launch; dispatch to the kernel only above a size
    # threshold in production code.
    """
    batch, in_f = x.shape
    out_f = w_lin.shape[0]
    tm, tn, tk = tiles if tiles is not None else _pick_tiles(batch, in_f, out_f)
    w_fused, b_fused, out_f, in_f = pack_glu_params(
        w_lin, b_lin, w_gate, b_gate, tn=tn, tk=tk)
    return gated_linear_unit_packed(x, w_fused, b_fused, out_f, in_f,
                                    tm=tm, tn=tn, tk=tk)


def _reference(x, w_lin, b_lin, w_gate, b_gate):
    return (x @ w_lin.T + b_lin) * jax.nn.sigmoid(x @ w_gate.T + b_gate)


if __name__ == "__main__":
    key = jax.random.PRNGKey(0)

    # ---- Case 1: module-sized toy shape (single grid point after padding) ----
    batch, in_features, out_features = 8, 32, 64
    k_x, k_wl, k_bl, k_wg, k_bg, key = jax.random.split(key, 6)
    bound = 1.0 / (in_features ** 0.5)
    x = jax.random.normal(k_x, (batch, in_features), dtype=jnp.float32)
    w_lin = jax.random.uniform(k_wl, (out_features, in_features),
                               minval=-bound, maxval=bound, dtype=jnp.float32)
    b_lin = jax.random.uniform(k_bl, (out_features,),
                               minval=-bound, maxval=bound, dtype=jnp.float32)
    w_gate = jax.random.uniform(k_wg, (out_features, in_features),
                                minval=-bound, maxval=bound, dtype=jnp.float32)
    b_gate = jax.random.uniform(k_bg, (out_features,),
                                minval=-bound, maxval=bound, dtype=jnp.float32)

    out = jax.block_until_ready(gated_linear_unit(x, w_lin, b_lin, w_gate, b_gate))
    ref = _reference(x, w_lin, b_lin, w_gate, b_gate)
    assert out.shape == (batch, out_features)
    assert jnp.allclose(out, ref, atol=1e-5, rtol=1e-5), "case-1 mismatch vs reference"

    # ---- Case 2: multi-tile grid (exercises K accumulation + finalize) ----
    batch2, in2, out2 = 64, 384, 256
    k_x, k_wl, k_bl, k_wg, k_bg, key = jax.random.split(key, 6)
    bound2 = 1.0 / (in2 ** 0.5)
    x2 = jax.random.normal(k_x, (batch2, in2), dtype=jnp.float32)
    w_lin2 = jax.random.uniform(k_wl, (out2, in2), minval=-bound2, maxval=bound2,
                                dtype=jnp.float32)
    b_lin2 = jax.random.uniform(k_bl, (out2,), minval=-bound2, maxval=bound2,
                                dtype=jnp.float32)
    w_gate2 = jax.random.uniform(k_wg, (out2, in2), minval=-bound2, maxval=bound2,
                                 dtype=jnp.float32)
    b_gate2 = jax.random.uniform(k_bg, (out2,), minval=-bound2, maxval=bound2,
                                 dtype=jnp.float32)

    # Force a (2, 2, 3) grid: tm=32, tn=128, tk=128.
    out2_res = jax.block_until_ready(
        gated_linear_unit(x2, w_lin2, b_lin2, w_gate2, b_gate2, tiles=(32, 128, 128)))
    ref2 = _reference(x2, w_lin2, b_lin2, w_gate2, b_gate2)
    assert out2_res.shape == (batch2, out2)
    assert jnp.allclose(out2_res, ref2, atol=1e-4, rtol=1e-4), "case-2 mismatch vs reference"

    print("KERNEL_OK")
</pallas_src>

<mosaic_0001>
module attributes {stable_mosaic.version = 11 : i64} {
  func.func @_glu_kernel(%arg0: i32, %arg1: i32, %arg2: i32, %arg3: memref<8x128xf32, #tpu.memory_space<vmem>>, %arg4: memref<128x256xf32, #tpu.memory_space<vmem>>, %arg5: memref<1x256xf32, #tpu.memory_space<vmem>>, %arg6: memref<8x128xf32, #tpu.memory_space<vmem>>, %arg7: memref<8x256xf32, #tpu.memory_space<vmem>>) attributes {dimension_semantics = [#tpu.dimension_semantics<parallel>, #tpu.dimension_semantics<parallel>, #tpu.dimension_semantics<arbitrary>], iteration_bounds = array<i64: 1, 1, 1>, scalar_prefetch = 0 : i64, scratch_operands = 1 : i64, tpu.core_type = #tpu.core_type<tc>, window_params = [{transform_indices = @transform_0, window_bounds = array<i64: 8, 128>}, {transform_indices = @transform_1, window_bounds = array<i64: 128, 256>}, {transform_indices = @transform_2, window_bounds = array<i64: 1, 256>}, {transform_indices = @transform_3, window_bounds = array<i64: 8, 128>}]} {
    %c0_i32 = arith.constant 0 : i32
    %0 = arith.cmpi eq, %arg2, %c0_i32 : i32
    %1 = arith.extui %0 : i1 to i32
    %c0_i32_0 = arith.constant 0 : i32
    %2 = arith.cmpi ne, %1, %c0_i32_0 : i32
    scf.if %2 {
      %cst_10 = arith.constant 0.000000e+00 : f32
      %12 = vector.broadcast %cst_10 : f32 to vector<8x256xf32>
      %c0_11 = arith.constant 0 : index
      %c0_12 = arith.constant 0 : index
      %13 = vector.load %arg7[%c0_11, %c0_12] : memref<8x256xf32, #tpu.memory_space<vmem>>, vector<8x256xf32>
      tpu.vector_store %arg7[%c0_11, %c0_12], %12 {strides = array<i32>} : memref<8x256xf32, #tpu.memory_space<vmem>>, vector<8x256xf32>,
    } else {
    }
    %c0 = arith.constant 0 : index
    %c0_1 = arith.constant 0 : index
    %3 = vector.load %arg7[%c0, %c0_1] : memref<8x256xf32, #tpu.memory_space<vmem>>, vector<8x256xf32>
    %c0_2 = arith.constant 0 : index
    %c0_3 = arith.constant 0 : index
    %4 = vector.load %arg3[%c0_2, %c0_3] : memref<8x128xf32, #tpu.memory_space<vmem>>, vector<8x128xf32>
    %c0_4 = arith.constant 0 : index
    %c0_5 = arith.constant 0 : index
    %5 = vector.load %arg4[%c0_4, %c0_5] : memref<128x256xf32, #tpu.memory_space<vmem>>, vector<128x256xf32>
    %cst = arith.constant dense<0.000000e+00> : vector<8x256xf32>
    %6 = tpu.matmul %4, %5, %cst {dimension_numbers = #tpu.dot_dimension_numbers<[1], [0], [0], [1], [0, 0, 1, 1], [], []>} : vector<8x128xf32>, vector<128x256xf32>, vector<8x256xf32> -> vector<8x256xf32>
    %7 = arith.addf %3, %6 : vector<8x256xf32>
    %c0_6 = arith.constant 0 : index
    %c0_7 = arith.constant 0 : index
    %8 = vector.load %arg7[%c0_6, %c0_7] : memref<8x256xf32, #tpu.memory_space<vmem>>, vector<8x256xf32>
    tpu.vector_store %arg7[%c0_6, %c0_7], %7 {strides = array<i32>} : memref<8x256xf32, #tpu.memory_space<vmem>>, vector<8x256xf32>,
    %c0_i32_8 = arith.constant 0 : i32
    %9 = arith.cmpi eq, %arg2, %c0_i32_8 : i32
    %10 = arith.extui %9 : i1 to i32
    %c0_i32_9 = arith.constant 0 : i32
    %11 = arith.cmpi ne, %10, %c0_i32_9 : i32
    scf.if %11 {
      %c0_10 = arith.constant 0 : index
      %c0_11 = arith.constant 0 : index
      %12 = vector.load %arg7[%c0_10, %c0_11] : memref<8x256xf32, #tpu.memory_space<vmem>>, vector<8x256xf32>
      %c0_12 = arith.constant 0 : index
      %c0_13 = arith.constant 0 : index
      %13 = vector.load %arg5[%c0_12, %c0_13] : memref<1x256xf32, #tpu.memory_space<vmem>>, vector<1x256xf32>
      %14 = vector.broadcast %13 : vector<1x256xf32> to vector<8x256xf32>
      %15 = arith.addf %12, %14 : vector<8x256xf32>
      %16 = vector.extract_strided_slice %15 {offsets = [0, 0], sizes = [8, 128], strides = [1, 1]} : vector<8x256xf32> to vector<8x128xf32>
      %17 = vector.extract_strided_slice %15 {offsets = [0, 128], sizes = [8, 128], strides = [1, 1]} : vector<8x256xf32> to vector<8x128xf32>
      %18 = arith.negf %17 : vector<8x128xf32>
      %19 = math.exp %18 : vector<8x128xf32>
      %cst_14 = arith.constant 1.000000e+00 : f32
      %20 = vector.broadcast %cst_14 : f32 to vector<8x128xf32>
      %21 = arith.addf %20, %19 : vector<8x128xf32>
      %22 = arith.divf %20, %21 : vector<8x128xf32>
      %23 = arith.mulf %16, %22 : vector<8x128xf32>
      %c0_15 = arith.constant 0 : index
      %c0_16 = arith.constant 0 : index
      %24 = vector.load %arg6[%c0_15, %c0_16] : memref<8x128xf32, #tpu.memory_space<vmem>>, vector<8x128xf32>
      tpu.vector_store %arg6[%c0_15, %c0_16], %23 {strides = array<i32>} : memref<8x128xf32, #tpu.memory_space<vmem>>, vector<8x128xf32>,
    } else {
    }
    return
  }
  func.func @transform_0(%arg0: i32, %arg1: i32, %arg2: i32) -> (i32, i32) {
    %c0_i32 = arith.constant 0 : i32
    return %arg0, %arg2 : i32, i32
  }
  func.func @transform_1(%arg0: i32, %arg1: i32, %arg2: i32) -> (i32, i32) {
    %c0_i32 = arith.constant 0 : i32
    return %arg2, %arg1 : i32, i32
  }
  func.func @transform_2(%arg0: i32, %arg1: i32, %arg2: i32) -> (i32, i32) {
    %c0_i32 = arith.constant 0 : i32
    %c0_i32_0 = arith.constant 0 : i32
    return %c0_i32, %arg1 : i32, i32
  }
  func.func @transform_3(%arg0: i32, %arg1: i32, %arg2: i32) -> (i32, i32) {
    %c0_i32 = arith.constant 0 : i32
    return %arg0, %arg1 : i32, i32
  }
}

</mosaic_0001>

<llo_original>
// kernel: tpu_custom_call.1
$region0: #{tpu_custom_call.1}
  #allocation0 [shape = 'u32[]', space=smem, size = 0x4, offset = 0x4, fixed_abs, tag = 'smem constant byte address 0x4 - core index']
  #allocation1 [shape = 'u32[144,128]{1,0:T(1,128)}', space=vmem, size = 0x12000, scoped, tag = 'internal scratch']
  #allocation2 [shape = 'f32[8,256]{1,0:T(8,128)}', space=vmem, size = 0x2000, scoped, tag = 'scratch operand']
  %s0 = inlined_call_operand.hbm [shape: f32[8,128], index: 0, kind: input, shape index: {}]
  %s1 = inlined_call_operand.hbm [shape: f32[128,256], index: 1, kind: input, shape index: {}]
  %s2 = inlined_call_operand.vmem [shape: f32[1,256], index: 2, kind: input, shape index: {}]
  %s3 = inlined_call_operand.hbm [shape: f32[8,128], index: 3, kind: output, shape index: {}]
  %s4 = sld [smem:[#allocation0]]
  $region38: #{tpu_custom_call.1} parent=0
    _
  %s6 = ssub.s32 1, %s4
  %s7 = scalar_select 0, %s6, %s4
  $region1: #{tpu_custom_call.1} parent=0
    #allocation3 [shape = 'u8[4096]{0}', space=vmem, size = 0x1000, scoped, tag = 'input window, operand 0, single buffered']
    #allocation4 [shape = 's32[1]{0}', space=sflag, size = 0x4, scoped, tag = 'scoped memory for tpu_custom_call.1']
    #allocation5 [shape = 's32[1]{0}', space=sflag, size = 0x4, scoped, tag = 'scoped memory for tpu_custom_call.1']
    #allocation6 [shape = 'u8[131072]{0}', space=vmem, size = 0x20000, scoped, tag = 'input window, operand 1, single buffered']
    #allocation7 [shape = 's32[1]{0}', space=sflag, size = 0x4, scoped, tag = 'scoped memory for tpu_custom_call.1']
    #allocation8 [shape = 'u8[4096]{0}', space=vmem, size = 0x1000, scoped, tag = 'output window, operand 0, single buffered']
    %8 = vsyncpa [#allocation4], 0
    %9 = vsyncpa [#allocation7], 0
    %10 = vsyncpa [#allocation5], 0
    // Predicated region
    $region2: #{tpu_custom_call.1} parent=1 // pred_check
      _
    $region3: #{tpu_custom_call.1} parent=1 // pred_check_branch
      %12 = sbr.rel (0) target = $region5
    $region4: #{tpu_custom_call.1} parent=1 // pred_region
      %s14 = ssub.s32 128, 128
      %15 = vsyncadd [#allocation4], %s14
      %s17 = sshll.u32 [#allocation3], 4
      %s18 = int_to_ptr.vmem [resolvable:$true] %s17
      %20 = dma.hbm_to_vmem [thread:$0]  %s0, 128, %s18, [#allocation4]
    $region5: #{tpu_custom_call.1} parent=1 // pred_fallthru
      _
    // Predicated region
    $region6: #{tpu_custom_call.1} parent=1 // pred_check
      _
    $region7: #{tpu_custom_call.1} parent=1 // pred_check_branch
      %22 = sbr.rel (0) target = $region9
    $region8: #{tpu_custom_call.1} parent=1 // pred_region
      %s24 = ssub.s32 4096, 4096
      %25 = vsyncadd [#allocation7], %s24
      %s26 = sshll.u32 [#allocation6], 4
      %s27 = int_to_ptr.vmem [resolvable:$true] %s26
      %32 = dma.hbm_to_vmem [thread:$0]  %s1, 4096, %s27, [#allocation7], 256, 256, 16
    $region9: #{tpu_custom_call.1} parent=1 // pred_fallthru
      _
    // Predicated region
    $region10: #{tpu_custom_call.1} parent=1 // pred_check
      _
    $region11: #{tpu_custom_call.1} parent=1 // pred_check_branch
      %34 = sbr.rel (0) target = $region13
    $region12: #{tpu_custom_call.1} parent=1 // pred_region
      _
    $region13: #{tpu_custom_call.1} parent=1 // pred_fallthru
      _
    // Predicated region
    $region14: #{tpu_custom_call.1} parent=1 // pred_check
      _
    $region15: #{tpu_custom_call.1} parent=1 // pred_check_branch
      %36 = sbr.rel (0) target = $region17
    $region16: #{tpu_custom_call.1} parent=1 // pred_region
      %37 = dma.done [#allocation4], 128
    $region17: #{tpu_custom_call.1} parent=1 // pred_fallthru
      _
    // Predicated region
    $region18: #{tpu_custom_call.1} parent=1 // pred_check
      _
    $region19: #{tpu_custom_call.1} parent=1 // pred_check_branch
      %39 = sbr.rel (0) target = $region21
    $region20: #{tpu_custom_call.1} parent=1 // pred_region
      %40 = dma.done [#allocation7], 4096
    $region21: #{tpu_custom_call.1} parent=1 // pred_fallthru
      _
    %p41 = scmp.eq.s32.totalorder 0, 0
    // Predicated region
    $region22: #{tpu_custom_call.1} parent=1 // pred_check
      %p42 = pneg %p41
    $region23: #{tpu_custom_call.1} parent=1 // pred_check_branch
      %44 = sbr.rel (%p42) target = $region25
    $region24: #{tpu_custom_call.1} parent=1 // pred_region
      %45 = vst [vmem:[#allocation2] sm:$0xff] 0.0
      %46 = vst [vmem:[#allocation2 + $0x8] sm:$0xff] 0.0
    $region25: #{tpu_custom_call.1} parent=1 // pred_fallthru
      _
    %v47 = vld [vmem:[#allocation2] sm:$0xff]
    %v48 = vld [vmem:[#allocation2 + $0x8] sm:$0xff]
    %v49 = vld [vmem:[#allocation3] sm:$0xff]
    %v50 = vld [vmem:[#allocation6] sm:$0xff]
    %v51 = vld [vmem:[#allocation6 + $0x8] sm:$0xff]
    %v52 = vld [vmem:[#allocation6 + $0x10] sm:$0xff]
    %v53 = vld [vmem:[#allocation6 + $0x18] sm:$0xff]
    %v54 = vld [vmem:[#allocation6 + $0x20] sm:$0xff]
    %v55 = vld [vmem:[#allocation6 + $0x28] sm:$0xff]
    %v56 = vld [vmem:[#allocation6 + $0x30] sm:$0xff]
    %v57 = vld [vmem:[#allocation6 + $0x38] sm:$0xff]
    %v58 = vld [vmem:[#allocation6 + $0x40] sm:$0xff]
    %v59 = vld [vmem:[#allocation6 + $0x48] sm:$0xff]
    %v60 = vld [vmem:[#allocation6 + $0x50] sm:$0xff]
    %v61 = vld [vmem:[#allocation6 + $0x58] sm:$0xff]
    %v62 = vld [vmem:[#allocation6 + $0x60] sm:$0xff]
    %v63 = vld [vmem:[#allocation6 + $0x68] sm:$0xff]
    %v64 = vld [vmem:[#allocation6 + $0x70] sm:$0xff]
    %v65 = vld [vmem:[#allocation6 + $0x78] sm:$0xff]
    %v66 = vld [vmem:[#allocation6 + $0x80] sm:$0xff]
    %v67 = vld [vmem:[#allocation6 + $0x88] sm:$0xff]
    %v68 = vld [vmem:[#allocation6 + $0x90] sm:$0xff]
    %v69 = vld [vmem:[#allocation6 + $0x98] sm:$0xff]
    %v70 = vld [vmem:[#allocation6 + $0xa0] sm:$0xff]
    %v71 = vld [vmem:[#allocation6 + $0xa8] sm:$0xff]
    %v72 = vld [vmem:[#allocation6 + $0xb0] sm:$0xff]
    %v73 = vld [vmem:[#allocation6 + $0xb8] sm:$0xff]
    %v74 = vld [vmem:[#allocation6 + $0xc0] sm:$0xff]
    %v75 = vld [vmem:[#allocation6 + $0xc8] sm:$0xff]
    %v76 = vld [vmem:[#allocation6 + $0xd0] sm:$0xff]
    %v77 = vld [vmem:[#allocation6 + $0xd8] sm:$0xff]
    %v78 = vld [vmem:[#allocation6 + $0xe0] sm:$0xff]
    %v79 = vld [vmem:[#allocation6 + $0xe8] sm:$0xff]
    %v80 = vld [vmem:[#allocation6 + $0xf0] sm:$0xff]
    %v81 = vld [vmem:[#allocation6 + $0xf8] sm:$0xff]
    %82 = vmatprep.subr.mxu0 %v51
    %83 = vmatpush1.msra.mxu0 %v50
    %84 = vmatprep.subr.mxu0 %v53
    %85 = vmatpush1.msra.mxu0 %v52
    %86 = vmatprep.subr.mxu0 %v55
    %87 = vmatpush1.msra.mxu0 %v54
    %88 = vmatprep.subr.mxu0 %v57
    %89 = vmatpush1.msra.mxu0 %v56
    %90 = vmatprep.subr.mxu0 %v59
    %91 = vmatpush1.msra.mxu0 %v58
    %92 = vmatprep.subr.mxu0 %v61
    %93 = vmatpush1.msra.mxu0 %v60
    %94 = vmatprep.subr.mxu0 %v63
    %95 = vmatpush1.msra.mxu0 %v62
    %96 = vmatprep.subr.mxu0 %v65
    %97 = vmatpush1.msra.mxu0 %v64
    %98 = vmatprep.subr.mxu0 %v67
    %99 = vmatpush1.msra.mxu0 %v66
    %100 = vmatprep.subr.mxu0 %v69
    %101 = vmatpush1.msra.mxu0 %v68
    %102 = vmatprep.subr.mxu0 %v71
    %103 = vmatpush1.msra.mxu0 %v70
    %104 = vmatprep.subr.mxu0 %v73
    %105 = vmatpush1.msra.mxu0 %v72
    %106 = vmatprep.subr.mxu0 %v75
    %107 = vmatpush1.msra.mxu0 %v74
    %108 = vmatprep.subr.mxu0 %v77
    %109 = vmatpush1.msra.mxu0 %v76
    %110 = vmatprep.subr.mxu0 %v79
    %111 = vmatpush1.msra.mxu0 %v78
    %112 = vmatprep.subr.mxu0 %v81
    %113 = vmatpush1.msra.mxu0 %v80
    %114 = vmatprep.subr.mxu0 0.0
    %115 = vmatpush1.msra.mxu0 0.0
    %116 = vmatprep.subr.mxu0 0.0
    %117 = vmatpush1.msra.mxu0 0.0
    %118 = vmatprep.subr.mxu0 0.0
    %119 = vmatpush1.msra.mxu0 0.0
    %120 = vmatprep.subr.mxu0 0.0
    %121 = vmatpush1.msra.mxu0 0.0
    %122 = vmatprep.subr.mxu0 0.0
    %123 = vmatpush1.msra.mxu0 0.0
    %124 = vmatprep.subr.mxu0 0.0
    %125 = vmatpush1.msra.mxu0 0.0
    %126 = vmatprep.subr.mxu0 0.0
    %127 = vmatpush1.msra.mxu0 0.0
    %128 = vmatprep.subr.mxu0 0.0
    %129 = vmatpush1.msra.mxu0 0.0
    %130 = vmatprep.subr.mxu0 0.0
    %131 = vmatpush1.msra.mxu0 0.0
    %132 = vmatprep.subr.mxu0 0.0
    %133 = vmatpush1.msra.mxu0 0.0
    %134 = vmatprep.subr.mxu0 0.0
    %135 = vmatpush1.msra.mxu0 0.0
    %136 = vmatprep.subr.mxu0 0.0
    %137 = vmatpush1.msra.mxu0 0.0
    %138 = vmatprep.subr.mxu0 0.0
    %139 = vmatpush1.msra.mxu0 0.0
    %140 = vmatprep.subr.mxu0 0.0
    %141 = vmatpush1.msra.mxu0 0.0
    %142 = vmatprep.subr.mxu0 0.0
    %143 = vmatpush1.msra.mxu0 0.0
    %144 = vmatprep.subr.mxu0 0.0
    %145 = vmatpush1.msra.mxu0 0.0
    %146 = vmatprep.mubr.f32.mxu0 0.0
    %147 = vmatmul.mubr.f32.gmra.mrb[0].mxu0 %v49
    %v148 = vpop.f32.mrb[0].mxu0
    %v149 = vadd.f32 0.0, %v148
    %v150 = vpop.f32.mrb[0].mxu0
    %v151 = vadd.f32 0.0, %v150
    %152 = vdwg.mxu0
    %v153 = vadd.f32 %v47, %v149
    %v154 = vadd.f32 %v48, %v151
    %155 = vst [vmem:[#allocation2] sm:$0xff] %v153
    %156 = vst [vmem:[#allocation2 + $0x8] sm:$0xff] %v154
    // Predicated region
    $region26: #{tpu_custom_call.1} parent=1 // pred_check
      %p157 = pneg %p41
    $region27: #{tpu_custom_call.1} parent=1 // pred_check_branch
      %159 = sbr.rel (%p157) target = $region29
    $region28: #{tpu_custom_call.1} parent=1 // pred_region
      %v160 = vld [vmem:[#allocation2] sm:$0xff]
      %v161 = vld [vmem:[#allocation2 + $0x8] sm:$0xff]
      %v162 = vld [vmem:[%s2] sm:$0x3]
      %v164 = vlaneseq
      %v165 = vshrl.u32 %v164, 7
      %v166 = vsub.s32 0, %v165
      %v167 = vrot.slane %v162, %v166
      %v168 = vlaneseq
      %v169 = vshrl.u32 %v168, 7
      %v170 = vsub.s32 1, %v169
      %v171 = vrot.slane %v162, %v170
      %v174 = vadd.f32 %v160, %v167
      %v175 = vadd.f32 %v161, %v171
      %v176 = vxor.u32 %v175, 2147483648
      %v177 = vmul.f32 %v176, 1.442695
      %v178 = vpow.pop %v177
      %v179 = vadd.f32 %v178, 1.0
      %v180 = vrcp.pop %v179
      %v181 = vmul.f32 1.0, %v180
      %v182 = vmul.f32 %v174, %v181
      %183 = vst [vmem:[#allocation8] sm:$0xff] %v182
    $region29: #{tpu_custom_call.1} parent=1 // pred_fallthru
      _
    // Predicated region
    $region30: #{tpu_custom_call.1} parent=1 // pred_check
      _
    $region31: #{tpu_custom_call.1} parent=1 // pred_check_branch
      %185 = sbr.rel (0) target = $region33
    $region32: #{tpu_custom_call.1} parent=1 // pred_region
      %s187 = ssub.s32 128, 128
      %188 = vsyncadd [#allocation5], %s187
      %s190 = sshll.u32 [#allocation8], 4
      %s191 = int_to_ptr.vmem [resolvable:$true] %s190
      %193 = dma.vmem_to_hbm [thread:$0]  %s191, 128, %s3, [#allocation5]
    $region33: #{tpu_custom_call.1} parent=1 // pred_fallthru
      _
    // Predicated region
    $region34: #{tpu_custom_call.1} parent=1 // pred_check
      _
    $region35: #{tpu_custom_call.1} parent=1 // pred_check_branch
      %195 = sbr.rel (0) target = $region37
    $region36: #{tpu_custom_call.1} parent=1 // pred_region
      %196 = dma.done [#allocation5], 128
    $region37: #{tpu_custom_call.1} parent=1 // pred_fallthru
      _
    %197 = vsyncpa [#allocation4], 1
    %198 = vsyncpa [#allocation7], 1
    %199 = vsyncpa [#allocation5], 1

</llo_original>
